<compile_context>
chip_gen: v7x
topology: tpu7x:2x2x1
jax: 0.10.0
libtpu: 0.0.40
codegen_flags: <defaults>
</compile_context>

<pallas_src>
import functools

import jax
import jax.numpy as jnp
from jax.experimental import pallas as pl
from jax.experimental.pallas import tpu as pltpu


LEAKY_SLOPE = 0.01
LN_EPS = 1e-5
F_IN = 21          # real input features
F_PAD = 32         # padded feature dim (sublane/lane friendly)
H1 = 128
H2 = 64
H3 = 32
H4 = 16
H_SC = 32
VEC_W = H1 + H_SC  # 160 — row width of the packed small-vector array


def _round_up(n, m):
    return ((n + m - 1) // m) * m


def _lrelu(x):
    # max(x, 0.01*x) == LeakyReLU(0.01) since slope < 1.
    return jnp.maximum(x, LEAKY_SLOPE * x)


def ddos_kernel(
    x_ref,        # (tb, 32)   bf16  streamed
    wcat_ref,     # (32, 160)  bf16  [fc1 | shortcut], resident
    w2_ref,       # (128, 64)  bf16  resident
    w3_ref,       # (64, 32)   bf16  resident
    w4_ref,       # (32, 16)   bf16  resident
    vec_ref,      # (8, 160)   f32   packed small vectors, resident
    o_ref,        # (1, tb)    f32   lane-dense output row
):
    # Packed rows: 0=b_cat(160) 1=ln_g(128) 2=ln_b(128) 3=b2(64) 4=b3(32)
    #              5=b4(16) 6=w5(16) 7=b5(1)
    vec = vec_ref[...]
    b_cat = vec[0:1, :]
    ln_g = vec[1:2, :H1]
    ln_b = vec[2:3, :H1]
    b2 = vec[3:4, :H2]
    b3 = vec[4:5, :H3]
    b4 = vec[5:6, :H4]
    w5 = vec[6:7, :H4]
    b5 = vec[7:8, 0:1]

    x = x_ref[...]                                           # (tb, 32) bf16

    # Fused fc1 + shortcut: one (tb,32) @ (32,160) matmul, then split columns.
    hcat = jnp.dot(x, wcat_ref[...],
                   preferred_element_type=jnp.float32) + b_cat
    h = hcat[:, :H1]                                         # fc1 pre-act (tb,128)
    sc = hcat[:, H1:H1 + H_SC]                               # shortcut    (tb,32)

    # LayerNorm(128): biased variance (matches torch), one-pass moments with
    # a non-negativity guard against catastrophic cancellation.
    mu = jnp.mean(h, axis=-1, keepdims=True)
    ms = jnp.mean(h * h, axis=-1, keepdims=True)
    inv = jax.lax.rsqrt(jnp.maximum(ms - mu * mu, 0.0) + LN_EPS)
    h = (h - mu) * inv * ln_g + ln_b
    h = _lrelu(h)
    # dropout(0.5): identity in eval mode.

    # fc2 -> LeakyReLU
    h = _lrelu(jnp.dot(h.astype(jnp.bfloat16), w2_ref[...],
                       preferred_element_type=jnp.float32) + b2)
    # dropout(0.5): identity in eval mode.

    # fc3 -> LeakyReLU, residual add of shortcut
    h = _lrelu(jnp.dot(h.astype(jnp.bfloat16), w3_ref[...],
                       preferred_element_type=jnp.float32) + b3)
    h = h + sc

    # fc4 -> LeakyReLU
    h = _lrelu(jnp.dot(h.astype(jnp.bfloat16), w4_ref[...],
                       preferred_element_type=jnp.float32) + b4)

    # fc5 (16 -> 1), computed lane-dense: (1,16) contracted with (tb,16) on
    # the 16-axis gives a (1, tb) row -> unmasked store, lane-dense sigmoid.
    logits = jax.lax.dot_general(
        w5, h, dimension_numbers=(((1,), (1,)), ((), ())),
        preferred_element_type=jnp.float32) + b5             # (1, tb)
    o_ref[...] = jax.nn.sigmoid(logits).astype(o_ref.dtype)


def prepare_params(p):
    """Fuse / pad / cast f32 torch-layout params into kernel-ready arrays.

    Call once; the result can be reused across ddos_forward calls.
    """
    w_cat = jnp.concatenate([p["w1"], p["wsc"]], axis=1)         # (21, 160)
    w_cat = jnp.pad(w_cat, ((0, F_PAD - F_IN), (0, 0)))          # (32, 160)
    b_cat = jnp.concatenate([p["b1"], p["bsc"]], axis=1)         # (1, 160)

    def row(v):
        v = jnp.ravel(v).astype(jnp.float32)
        return jnp.pad(v, (0, VEC_W - v.shape[0]))

    vec = jnp.stack([row(b_cat), row(p["ln_g"]), row(p["ln_b"]),
                     row(p["b2"]), row(p["b3"]), row(p["b4"]),
                     row(p["w5"]), row(p["b5"])], axis=0)        # (8, 160) f32

    return dict(
        w_cat=w_cat.astype(jnp.bfloat16),
        w2=p["w2"].astype(jnp.bfloat16),
        w3=p["w3"].astype(jnp.bfloat16),
        w4=p["w4"].astype(jnp.bfloat16),
        vec=vec,
    )


def _choose_tiles(B, batch_tile):
    """Balanced batch tile: bounds padding waste, >=2 steps when B >= 32
    (so both v7x TensorCores can be used), multiple of 16 (bf16 sublanes),
    multiple of 128 once tiles are large (lane-dense output rows)."""
    n_steps = max(1, pl.cdiv(B, batch_tile))
    if B >= 32:
        n_steps = max(n_steps, 2)
    per = pl.cdiv(B, n_steps)
    align = 128 if per >= 128 else 16
    tb = _round_up(per, align)
    n_steps = pl.cdiv(B, tb)
    return tb, n_steps


@functools.partial(jax.jit, static_argnames=("batch_tile",))
def ddos_forward(x, kp, *, batch_tile=2048):
    """x: (B, 21) float32. kp: prepared params from prepare_params()."""
    B, F = x.shape
    assert F == F_IN
    tb, n_steps = _choose_tiles(B, batch_tile)
    B_pad = tb * n_steps

    # Stream x as bf16, feature-padded 21 -> 32 (halves the dominant HBM read
    # vs f32; the MXU operands are bf16 anyway).
    x_pad = jnp.pad(x.astype(jnp.bfloat16),
                    ((0, B_pad - B), (0, F_PAD - F_IN)))

    def resident(shape):
        nd = len(shape)
        # Whole array as one block, constant index map -> fetched once,
        # stays VMEM-resident across all batch tiles.
        return pl.BlockSpec(shape, lambda i: (0,) * nd)

    out = pl.pallas_call(
        ddos_kernel,
        out_shape=jax.ShapeDtypeStruct((n_steps, tb), jnp.float32),
        grid=(n_steps,),
        in_specs=[
            pl.BlockSpec((tb, F_PAD), lambda i: (i, 0)),   # streamed x
            resident(kp["w_cat"].shape),
            resident(kp["w2"].shape),
            resident(kp["w3"].shape),
            resident(kp["w4"].shape),
            resident(kp["vec"].shape),
        ],
        out_specs=pl.BlockSpec((1, tb), lambda i: (i, 0)),  # lane-dense row
        compiler_params=pltpu.CompilerParams(
            dimension_semantics=("parallel",),
            vmem_limit_bytes=32 * 1024 * 1024),
    )(x_pad, kp["w_cat"], kp["w2"], kp["w3"], kp["w4"], kp["vec"])

    return out.reshape(-1, 1)[:B]


def _linear_init(key, fan_in, fan_out):
    # Deterministic stand-in for torch's kaiming-uniform Linear init.
    kw, kb = jax.random.split(key)
    bound = 1.0 / jnp.sqrt(jnp.float32(fan_in))
    w = jax.random.uniform(kw, (fan_in, fan_out), jnp.float32, -bound, bound)
    b = jax.random.uniform(kb, (1, fan_out), jnp.float32, -bound, bound)
    return w, b


def init_params(key):
    keys = jax.random.split(key, 6)
    w1, b1 = _linear_init(keys[0], 21, 128)
    w2, b2 = _linear_init(keys[1], 128, 64)
    w3, b3 = _linear_init(keys[2], 64, 32)
    w4, b4 = _linear_init(keys[3], 32, 16)
    w5, b5 = _linear_init(keys[4], 16, 1)
    wsc, bsc = _linear_init(keys[5], 21, 32)
    return dict(
        w1=w1, b1=b1,
        ln_g=jnp.ones((1, 128), jnp.float32),   # torch LayerNorm default weight
        ln_b=jnp.zeros((1, 128), jnp.float32),  # torch LayerNorm default bias
        w2=w2, b2=b2,
        w3=w3, b3=b3,
        wsc=wsc, bsc=bsc,
        w4=w4, b4=b4,
        w5=w5, b5=b5,
    )


def _reference(x, p):
    # Pure-JAX f32 reference of the torch forward pass (eval mode).
    def lrelu(v):
        return jnp.where(v >= 0, v, LEAKY_SLOPE * v)
    h = x @ p["w1"] + p["b1"]
    mu = h.mean(-1, keepdims=True)
    var = ((h - mu) ** 2).mean(-1, keepdims=True)
    h = (h - mu) / jnp.sqrt(var + LN_EPS) * p["ln_g"] + p["ln_b"]
    h = lrelu(h)
    h = lrelu(h @ p["w2"] + p["b2"])
    h = lrelu(h @ p["w3"] + p["b3"])
    h = h + (x @ p["wsc"] + p["bsc"])
    h = lrelu(h @ p["w4"] + p["b4"])
    return jax.nn.sigmoid(h @ p["w5"] + p["b5"])


if __name__ == "__main__":
    key = jax.random.PRNGKey(0)
    kx, kp_key = jax.random.split(key)
    params = init_params(kp_key)
    kp = prepare_params(params)   # hoisted out of the per-call path

    # Case 1: tiny batch (exercises batch 10 -> 16 and feature 21 -> 32 padding).
    x1 = jax.random.normal(kx, (10, F_IN), jnp.float32)
    out1 = jax.block_until_ready(ddos_forward(x1, kp))
    ref1 = _reference(x1, params)
    assert out1.shape == (10, 1)
    # bf16 MXU operands vs f32 reference -> loosened tolerance (output in (0,1)).
    assert jnp.allclose(out1, ref1, atol=2e-2, rtol=2e-2), (
        f"mismatch vs reference, max abs diff = {jnp.max(jnp.abs(out1 - ref1))}")

    # Case 2: multi-step grid (2 batch tiles; exercises the parallel grid axis
    # and the lane-dense output reassembly).
    x2 = jax.random.normal(jax.random.PRNGKey(1), (48, F_IN), jnp.float32)
    out2 = jax.block_until_ready(ddos_forward(x2, kp))
    ref2 = _reference(x2, params)
    assert out2.shape == (48, 1)
    assert jnp.allclose(out2, ref2, atol=2e-2, rtol=2e-2), (
        f"mismatch vs reference, max abs diff = {jnp.max(jnp.abs(out2 - ref2))}")

    print("KERNEL_OK")
</pallas_src>

<mosaic_0001>
module attributes {stable_mosaic.version = 11 : i64} {
  func.func @ddos_kernel(%arg0: i32, %arg1: memref<16x32xbf16, #tpu.memory_space<vmem>>, %arg2: memref<32x160xbf16, #tpu.memory_space<vmem>>, %arg3: memref<128x64xbf16, #tpu.memory_space<vmem>>, %arg4: memref<64x32xbf16, #tpu.memory_space<vmem>>, %arg5: memref<32x16xbf16, #tpu.memory_space<vmem>>, %arg6: memref<8x160xf32, #tpu.memory_space<vmem>>, %arg7: memref<1x16xf32, #tpu.memory_space<vmem>>) attributes {dimension_semantics = [#tpu.dimension_semantics<parallel>], iteration_bounds = array<i64: 1>, scalar_prefetch = 0 : i64, scratch_operands = 0 : i64, tpu.core_type = #tpu.core_type<tc>, window_params = [{transform_indices = @transform_0, window_bounds = array<i64: 16, 32>}, {pipeline_mode = #tpu.pipeline_mode<synchronous>, transform_indices = @transform_1, window_bounds = array<i64: 32, 160>}, {pipeline_mode = #tpu.pipeline_mode<synchronous>, transform_indices = @transform_2, window_bounds = array<i64: 128, 64>}, {pipeline_mode = #tpu.pipeline_mode<synchronous>, transform_indices = @transform_3, window_bounds = array<i64: 64, 32>}, {pipeline_mode = #tpu.pipeline_mode<synchronous>, transform_indices = @transform_4, window_bounds = array<i64: 32, 16>}, {pipeline_mode = #tpu.pipeline_mode<synchronous>, transform_indices = @transform_5, window_bounds = array<i64: 8, 160>}, {transform_indices = @transform_6, window_bounds = array<i64: 1, 16>}]} {
    %c0 = arith.constant 0 : index
    %c0_0 = arith.constant 0 : index
    %0 = vector.load %arg6[%c0, %c0_0] : memref<8x160xf32, #tpu.memory_space<vmem>>, vector<8x160xf32>
    %1 = vector.extract_strided_slice %0 {offsets = [0, 0], sizes = [1, 160], strides = [1, 1]} : vector<8x160xf32> to vector<1x160xf32>
    %2 = vector.extract_strided_slice %0 {offsets = [1, 0], sizes = [1, 128], strides = [1, 1]} : vector<8x160xf32> to vector<1x128xf32>
    %3 = vector.extract_strided_slice %0 {offsets = [2, 0], sizes = [1, 128], strides = [1, 1]} : vector<8x160xf32> to vector<1x128xf32>
    %4 = vector.extract_strided_slice %0 {offsets = [3, 0], sizes = [1, 64], strides = [1, 1]} : vector<8x160xf32> to vector<1x64xf32>
    %5 = vector.extract_strided_slice %0 {offsets = [4, 0], sizes = [1, 32], strides = [1, 1]} : vector<8x160xf32> to vector<1x32xf32>
    %6 = vector.extract_strided_slice %0 {offsets = [5, 0], sizes = [1, 16], strides = [1, 1]} : vector<8x160xf32> to vector<1x16xf32>
    %7 = vector.extract_strided_slice %0 {offsets = [6, 0], sizes = [1, 16], strides = [1, 1]} : vector<8x160xf32> to vector<1x16xf32>
    %8 = vector.extract_strided_slice %0 {offsets = [7, 0], sizes = [1, 1], strides = [1, 1]} : vector<8x160xf32> to vector<1x1xf32>
    %c0_1 = arith.constant 0 : index
    %c0_2 = arith.constant 0 : index
    %9 = vector.load %arg1[%c0_1, %c0_2] : memref<16x32xbf16, #tpu.memory_space<vmem>>, vector<16x32xbf16>
    %c0_3 = arith.constant 0 : index
    %c0_4 = arith.constant 0 : index
    %10 = vector.load %arg2[%c0_3, %c0_4] : memref<32x160xbf16, #tpu.memory_space<vmem>>, vector<32x160xbf16>
    %cst = arith.constant dense<0.000000e+00> : vector<16x160xf32>
    %11 = tpu.matmul %9, %10, %cst {dimension_numbers = #tpu.dot_dimension_numbers<[1], [0], [0], [1], [0, 0, 1, 1], [], []>} : vector<16x32xbf16>, vector<32x160xbf16>, vector<16x160xf32> -> vector<16x160xf32>
    %12 = vector.broadcast %1 : vector<1x160xf32> to vector<16x160xf32>
    %13 = arith.addf %11, %12 : vector<16x160xf32>
    %14 = vector.extract_strided_slice %13 {offsets = [0, 0], sizes = [16, 128], strides = [1, 1]} : vector<16x160xf32> to vector<16x128xf32>
    %15 = vector.extract_strided_slice %13 {offsets = [0, 128], sizes = [16, 32], strides = [1, 1]} : vector<16x160xf32> to vector<16x32xf32>
    %cst_5 = arith.constant dense<0.000000e+00> : vector<16xf32>
    %16 = vector.multi_reduction <add>, %14, %cst_5 [1] : vector<16x128xf32> to vector<16xf32>
    %17 = vector.shape_cast %16 : vector<16xf32> to vector<16x1xf32>
    %cst_6 = arith.constant 1.280000e+02 : f32
    %18 = vector.broadcast %cst_6 : f32 to vector<16x1xf32>
    %19 = arith.divf %17, %18 : vector<16x1xf32>
    %20 = arith.mulf %14, %14 : vector<16x128xf32>
    %cst_7 = arith.constant dense<0.000000e+00> : vector<16xf32>
    %21 = vector.multi_reduction <add>, %20, %cst_7 [1] : vector<16x128xf32> to vector<16xf32>
    %22 = vector.shape_cast %21 : vector<16xf32> to vector<16x1xf32>
    %cst_8 = arith.constant 1.280000e+02 : f32
    %23 = vector.broadcast %cst_8 : f32 to vector<16x1xf32>
    %24 = arith.divf %22, %23 : vector<16x1xf32>
    %25 = arith.mulf %19, %19 : vector<16x1xf32>
    %26 = arith.subf %24, %25 : vector<16x1xf32>
    %cst_9 = arith.constant 0.000000e+00 : f32
    %27 = vector.broadcast %cst_9 : f32 to vector<16x1xf32>
    %28 = arith.maximumf %26, %27 : vector<16x1xf32>
    %cst_10 = arith.constant 9.99999974E-6 : f32
    %29 = vector.broadcast %cst_10 : f32 to vector<16x1xf32>
    %30 = arith.addf %28, %29 : vector<16x1xf32>
    %31 = math.rsqrt %30 : vector<16x1xf32>
    %32 = vector.broadcast %19 : vector<16x1xf32> to vector<16x128xf32>
    %33 = arith.subf %14, %32 : vector<16x128xf32>
    %34 = vector.broadcast %31 : vector<16x1xf32> to vector<16x128xf32>
    %35 = arith.mulf %33, %34 : vector<16x128xf32>
    %36 = vector.broadcast %2 : vector<1x128xf32> to vector<16x128xf32>
    %37 = arith.mulf %35, %36 : vector<16x128xf32>
    %38 = vector.broadcast %3 : vector<1x128xf32> to vector<16x128xf32>
    %39 = arith.addf %37, %38 : vector<16x128xf32>
    %cst_11 = arith.constant 0.00999999977 : f32
    %40 = vector.broadcast %cst_11 : f32 to vector<16x128xf32>
    %41 = arith.mulf %40, %39 : vector<16x128xf32>
    %42 = arith.maximumf %39, %41 : vector<16x128xf32>
    %43 = arith.truncf %42 : vector<16x128xf32> to vector<16x128xbf16>
    %c0_12 = arith.constant 0 : index
    %c0_13 = arith.constant 0 : index
    %44 = vector.load %arg3[%c0_12, %c0_13] : memref<128x64xbf16, #tpu.memory_space<vmem>>, vector<128x64xbf16>
    %cst_14 = arith.constant dense<0.000000e+00> : vector<16x64xf32>
    %45 = tpu.matmul %43, %44, %cst_14 {dimension_numbers = #tpu.dot_dimension_numbers<[1], [0], [0], [1], [0, 0, 1, 1], [], []>} : vector<16x128xbf16>, vector<128x64xbf16>, vector<16x64xf32> -> vector<16x64xf32>
    %46 = vector.broadcast %4 : vector<1x64xf32> to vector<16x64xf32>
    %47 = arith.addf %45, %46 : vector<16x64xf32>
    %cst_15 = arith.constant 0.00999999977 : f32
    %48 = vector.broadcast %cst_15 : f32 to vector<16x64xf32>
    %49 = arith.mulf %48, %47 : vector<16x64xf32>
    %50 = arith.maximumf %47, %49 : vector<16x64xf32>
    %51 = arith.truncf %50 : vector<16x64xf32> to vector<16x64xbf16>
    %c0_16 = arith.constant 0 : index
    %c0_17 = arith.constant 0 : index
    %52 = vector.load %arg4[%c0_16, %c0_17] : memref<64x32xbf16, #tpu.memory_space<vmem>>, vector<64x32xbf16>
    %cst_18 = arith.constant dense<0.000000e+00> : vector<16x32xf32>
    %53 = tpu.matmul %51, %52, %cst_18 {dimension_numbers = #tpu.dot_dimension_numbers<[1], [0], [0], [1], [0, 0, 1, 1], [], []>} : vector<16x64xbf16>, vector<64x32xbf16>, vector<16x32xf32> -> vector<16x32xf32>
    %54 = vector.broadcast %5 : vector<1x32xf32> to vector<16x32xf32>
    %55 = arith.addf %53, %54 : vector<16x32xf32>
    %cst_19 = arith.constant 0.00999999977 : f32
    %56 = vector.broadcast %cst_19 : f32 to vector<16x32xf32>
    %57 = arith.mulf %56, %55 : vector<16x32xf32>
    %58 = arith.maximumf %55, %57 : vector<16x32xf32>
    %59 = arith.addf %58, %15 : vector<16x32xf32>
    %60 = arith.truncf %59 : vector<16x32xf32> to vector<16x32xbf16>
    %c0_20 = arith.constant 0 : index
    %c0_21 = arith.constant 0 : index
    %61 = vector.load %arg5[%c0_20, %c0_21] : memref<32x16xbf16, #tpu.memory_space<vmem>>, vector<32x16xbf16>
    %cst_22 = arith.constant dense<0.000000e+00> : vector<16x16xf32>
    %62 = tpu.matmul %60, %61, %cst_22 {dimension_numbers = #tpu.dot_dimension_numbers<[1], [0], [0], [1], [0, 0, 1, 1], [], []>} : vector<16x32xbf16>, vector<32x16xbf16>, vector<16x16xf32> -> vector<16x16xf32>
    %63 = vector.broadcast %6 : vector<1x16xf32> to vector<16x16xf32>
    %64 = arith.addf %62, %63 : vector<16x16xf32>
    %cst_23 = arith.constant 0.00999999977 : f32
    %65 = vector.broadcast %cst_23 : f32 to vector<16x16xf32>
    %66 = arith.mulf %65, %64 : vector<16x16xf32>
    %67 = arith.maximumf %64, %66 : vector<16x16xf32>
    %cst_24 = arith.constant dense<0.000000e+00> : vector<1x16xf32>
    %68 = tpu.matmul %7, %67, %cst_24 {dimension_numbers = #tpu.dot_dimension_numbers<[1], [1], [0], [0], [0, 0, 1, 0], [], []>} : vector<1x16xf32>, vector<16x16xf32>, vector<1x16xf32> -> vector<1x16xf32>
    %69 = vector.broadcast %8 : vector<1x1xf32> to vector<1x16xf32>
    %70 = arith.addf %68, %69 : vector<1x16xf32>
    %71 = arith.negf %70 : vector<1x16xf32>
    %72 = math.exp %71 : vector<1x16xf32>
    %cst_25 = arith.constant 1.000000e+00 : f32
    %73 = vector.broadcast %cst_25 : f32 to vector<1x16xf32>
    %74 = arith.addf %73, %72 : vector<1x16xf32>
    %75 = arith.divf %73, %74 : vector<1x16xf32>
    %c0_26 = arith.constant 0 : index
    %c0_27 = arith.constant 0 : index
    %76 = vector.load %arg7[%c0_26, %c0_27] : memref<1x16xf32, #tpu.memory_space<vmem>>, vector<1x16xf32>
    tpu.vector_store %arg7[%c0_26, %c0_27], %75 {strides = array<i32>} : memref<1x16xf32, #tpu.memory_space<vmem>>, vector<1x16xf32>,
    return
  }
  func.func @transform_0(%arg0: i32) -> (i32, i32) {
    %c0_i32 = arith.constant 0 : i32
    %c0_i32_0 = arith.constant 0 : i32
    return %arg0, %c0_i32 : i32, i32
  }
  func.func @transform_1(%arg0: i32) -> (i32, i32) {
    %c0_i32 = arith.constant 0 : i32
    %c0_i32_0 = arith.constant 0 : i32
    %c0_i32_1 = arith.constant 0 : i32
    return %c0_i32, %c0_i32_0 : i32, i32
  }
  func.func @transform_2(%arg0: i32) -> (i32, i32) {
    %c0_i32 = arith.constant 0 : i32
    %c0_i32_0 = arith.constant 0 : i32
    %c0_i32_1 = arith.constant 0 : i32
    return %c0_i32, %c0_i32_0 : i32, i32
  }
  func.func @transform_3(%arg0: i32) -> (i32, i32) {
    %c0_i32 = arith.constant 0 : i32
    %c0_i32_0 = arith.constant 0 : i32
    %c0_i32_1 = arith.constant 0 : i32
    return %c0_i32, %c0_i32_0 : i32, i32
  }
  func.func @transform_4(%arg0: i32) -> (i32, i32) {
    %c0_i32 = arith.constant 0 : i32
    %c0_i32_0 = arith.constant 0 : i32
    %c0_i32_1 = arith.constant 0 : i32
    return %c0_i32, %c0_i32_0 : i32, i32
  }
  func.func @transform_5(%arg0: i32) -> (i32, i32) {
    %c0_i32 = arith.constant 0 : i32
    %c0_i32_0 = arith.constant 0 : i32
    %c0_i32_1 = arith.constant 0 : i32
    return %c0_i32, %c0_i32_0 : i32, i32
  }
  func.func @transform_6(%arg0: i32) -> (i32, i32) {
    %c0_i32 = arith.constant 0 : i32
    %c0_i32_0 = arith.constant 0 : i32
    return %arg0, %c0_i32 : i32, i32
  }
}

</mosaic_0001>

<llo_original>
// kernel: ddos_forward.1
$region0: #{ddos_forward.1}
  #allocation0 [shape = 'u32[]', space=smem, size = 0x4, offset = 0x4, fixed_abs, tag = 'smem constant byte address 0x4 - core index']
  #allocation1 [shape = 'u32[144,128]{1,0:T(1,128)}', space=vmem, size = 0x12000, scoped, tag = 'internal scratch']
  %s0 = inlined_call_operand.vmem [shape: bf16[16,32], index: 0, kind: input, shape index: {}]
  %s1 = inlined_call_operand.vmem [shape: bf16[32,160], index: 1, kind: input, shape index: {}]
  %s2 = inlined_call_operand.vmem [shape: bf16[128,64], index: 2, kind: input, shape index: {}]
  %s3 = inlined_call_operand.vmem [shape: bf16[64,32], index: 3, kind: input, shape index: {}]
  %s4 = inlined_call_operand.vmem [shape: bf16[32,16], index: 4, kind: input, shape index: {}]
  %s5 = inlined_call_operand.vmem [shape: f32[8,160], index: 5, kind: input, shape index: {}]
  %s6 = inlined_call_operand.vmem [shape: f32[1,16], index: 6, kind: output, shape index: {}]
  %s7 = sld [smem:[#allocation0]]
  $region34: #{ddos_forward.1} parent=0
    _
  %s9 = ssub.s32 1, %s7
  %s10 = scalar_select 0, %s9, %s7
  // Predicated region
  $region2: #{ddos_forward.1} parent=0 // pred_check
    _
  $region3: #{ddos_forward.1} parent=0 // pred_check_branch
    %12 = sbr.rel (0) target = $region5
  $region4: #{ddos_forward.1} parent=0 // pred_region
    _
  $region5: #{ddos_forward.1} parent=0 // pred_fallthru
    _
  // Predicated region
  $region6: #{ddos_forward.1} parent=0 // pred_check
    _
  $region7: #{ddos_forward.1} parent=0 // pred_check_branch
    %14 = sbr.rel (0) target = $region9
  $region8: #{ddos_forward.1} parent=0 // pred_region
    _
  $region9: #{ddos_forward.1} parent=0 // pred_fallthru
    _
  // Predicated region
  $region10: #{ddos_forward.1} parent=0 // pred_check
    _
  $region11: #{ddos_forward.1} parent=0 // pred_check_branch
    %16 = sbr.rel (0) target = $region13
  $region12: #{ddos_forward.1} parent=0 // pred_region
    _
  $region13: #{ddos_forward.1} parent=0 // pred_fallthru
    _
  // Predicated region
  $region14: #{ddos_forward.1} parent=0 // pred_check
    _
  $region15: #{ddos_forward.1} parent=0 // pred_check_branch
    %18 = sbr.rel (0) target = $region17
  $region16: #{ddos_forward.1} parent=0 // pred_region
    _
  $region17: #{ddos_forward.1} parent=0 // pred_fallthru
    _
  // Predicated region
  $region18: #{ddos_forward.1} parent=0 // pred_check
    _
  $region19: #{ddos_forward.1} parent=0 // pred_check_branch
    %20 = sbr.rel (0) target = $region21
  $region20: #{ddos_forward.1} parent=0 // pred_region
    _
  $region21: #{ddos_forward.1} parent=0 // pred_fallthru
    _
  // Predicated region
  $region22: #{ddos_forward.1} parent=0 // pred_check
    _
  $region23: #{ddos_forward.1} parent=0 // pred_check_branch
    %22 = sbr.rel (0) target = $region25
  $region24: #{ddos_forward.1} parent=0 // pred_region
    _
  $region25: #{ddos_forward.1} parent=0 // pred_fallthru
    _
  %v24 = vld [vmem:[%s5] sm:$0xff]
  %v25 = vld [vmem:[%s5 + $0x8] sm:$0xff]
  %v26 = vld [vmem:[%s0] sm:$0xf]
  %v27 = vld [vmem:[%s0 + $0x4] sm:$0xf]
  %v28 = vld [vmem:[%s1] sm:$0xff]
  %v29 = vld [vmem:[%s1 + $0x8] sm:$0xff]
  %v30 = vld [vmem:[%s1 + $0x10] sm:$0xff]
  %v31 = vld [vmem:[%s1 + $0x18] sm:$0xff]
  %v32 = vlaneseq
  %v33 = vshrl.u32 %v32, 7
  %v34 = vsub.s32 0, %v33
  %v35 = vrot.slane %v24, %v34
  %v36 = vlaneseq
  %v37 = vshrl.u32 %v36, 7
  %v38 = vsub.s32 0, %v37
  %v39 = vrot.slane %v25, %v38
  %v42 = vunpack.c.l.b16 %v26
  %v43 = vunpack.c.l.b16 %v27
  %v44 = vpack.c.b16 %v43, %v42
  %v49 = vunpack.c.l.b16 %v28
  %v50 = vunpack.c.h.b16 %v28
  %v51 = vunpack.c.l.b16 %v29
  %v52 = vunpack.c.h.b16 %v29
  %v53 = vunpack.c.l.b16 %v30
  %v54 = vunpack.c.h.b16 %v30
  %v55 = vunpack.c.l.b16 %v31
  %v56 = vunpack.c.h.b16 %v31
  %v57 = vpack.c.b16 %v51, %v49
  %v58 = vpack.c.b16 %v52, %v50
  %v59 = vpack.c.b16 %v55, %v53
  %v60 = vpack.c.b16 %v56, %v54
  %vm65 = vcmask 261120
  %v67 = vsel %vm65, %v44, 0
  %69 = vmatprep.subr.bf16.mxu0 %v58
  %70 = vmatpush1.bf16.msra.mxu0 %v57
  %71 = vmatprep.subr.bf16.mxu0 %v60
  %72 = vmatpush1.bf16.msra.mxu0 %v59
  %73 = vmatprep.subr.bf16.mxu0 0
  %74 = vmatpush1.bf16.msra.mxu0 0
  %75 = vmatprep.subr.bf16.mxu0 0
  %76 = vmatpush1.bf16.msra.mxu0 0
  %77 = vmatprep.subr.bf16.mxu0 0
  %78 = vmatpush1.bf16.msra.mxu0 0
  %79 = vmatprep.subr.bf16.mxu0 0
  %80 = vmatpush1.bf16.msra.mxu0 0
  %81 = vmatprep.subr.bf16.mxu0 0
  %82 = vmatpush1.bf16.msra.mxu0 0
  %83 = vmatprep.subr.bf16.mxu0 0
  %84 = vmatpush1.bf16.msra.mxu0 0
  %85 = vmatprep.subr.bf16.mxu0 0
  %86 = vmatpush1.bf16.msra.mxu0 0
  %87 = vmatprep.subr.bf16.mxu0 0
  %88 = vmatpush1.bf16.msra.mxu0 0
  %89 = vmatprep.subr.bf16.mxu0 0
  %90 = vmatpush1.bf16.msra.mxu0 0
  %91 = vmatprep.subr.bf16.mxu0 0
  %92 = vmatpush1.bf16.msra.mxu0 0
  %93 = vmatprep.subr.bf16.mxu0 0
  %94 = vmatpush1.bf16.msra.mxu0 0
  %95 = vmatprep.subr.bf16.mxu0 0
  %96 = vmatpush1.bf16.msra.mxu0 0
  %97 = vmatprep.subr.bf16.mxu0 0
  %98 = vmatpush1.bf16.msra.mxu0 0
  %99 = vmatprep.subr.bf16.mxu0 0
  %100 = vmatpush1.bf16.msra.mxu0 0
  %101 = vmatprep.mubr.bf16.mxu0 0
  %102 = vmatmul.mubr.bf16.gmra.mrb[0].mxu0 %v67
  %v103 = vpop.f32.mrb[0].mxu0
  %v104 = vadd.f32 %v35, %v103
  %v105 = vpop.f32.mrb[0].mxu0
  %v106 = vadd.f32 %v39, %v105
  %v107 = vpop.f32.mrb[0].mxu0
  %v108 = vadd.f32 %v35, %v107
  %v109 = vpop.f32.mrb[0].mxu0
  %v110 = vadd.f32 %v39, %v109
  %111 = vdwg.mxu0
  %112 = vadd.xlane.f32.xlu0 %v104
  %v113 = vpop.xlane.xlu0 %112
  %114 = vadd.xlane.f32.xlu0 %v108
  %v115 = vpop.xlane.xlu0 %114
  %v116 = vrcp.pop 128.0
  %v117 = vmul.f32 %v113, %v116
  %v118 = vmul.f32 %v115, %v116
  %v119 = vmul.f32 %v104, %v104
  %v120 = vmul.f32 %v108, %v108
  %121 = vadd.xlane.f32.xlu0 %v119
  %v122 = vpop.xlane.xlu0 %121
  %123 = vadd.xlane.f32.xlu0 %v120
  %v124 = vpop.xlane.xlu0 %123
  %v125 = vmul.f32 %v122, %v116
  %v126 = vmul.f32 %v124, %v116
  %v127 = vmul.f32 %v117, %v117
  %v128 = vmul.f32 %v118, %v118
  %v129 = vsub.f32 %v125, %v127
  %v130 = vsub.f32 %v126, %v128
  %v131 = vmax.f32 %v129, 0.0
  %v132 = vmax.f32 %v130, 0.0
  %v133 = vadd.f32 %v131, 1e-05
  %v134 = vadd.f32 %v132, 1e-05
  %v135 = vrsqrt.pop %v133
  %v136 = vrsqrt.pop %v134
  %v137 = vsub.f32 %v104, %v117
  %v138 = vsub.f32 %v108, %v118
  %v139 = vmul.f32 %v137, %v135
  %v140 = vmul.f32 %v138, %v136
  %v141 = vlaneseq
  %v142 = vshrl.u32 %v141, 7
  %v143 = vsub.s32 1, %v142
  %v144 = vrot.slane %v24, %v143
  %v145 = vmul.f32 %v139, %v144
  %v146 = vmul.f32 %v140, %v144
  %v147 = vlaneseq
  %v148 = vshrl.u32 %v147, 7
  %v149 = vsub.s32 2, %v148
  %v150 = vrot.slane %v24, %v149
  %v151 = vadd.f32 %v145, %v150
  %v152 = vadd.f32 %v146, %v150
  %v153 = vmul.f32 %v151, 0.01
  %v154 = vmul.f32 %v152, 0.01
  %v155 = vmax.f32 %v151, %v153
  %v156 = vmax.f32 %v152, %v154
  %v157 = vpack.c.bf16 %v156, %v155
  %v158 = vld [vmem:[%s2] sm:$0xf]
  %v159 = vld [vmem:[%s2 + $0x4] sm:$0xf]
  %v160 = vld [vmem:[%s2 + $0x8] sm:$0xf]
  %v161 = vld [vmem:[%s2 + $0xc] sm:$0xf]
  %v162 = vld [vmem:[%s2 + $0x10] sm:$0xf]
  %v163 = vld [vmem:[%s2 + $0x14] sm:$0xf]
  %v164 = vld [vmem:[%s2 + $0x18] sm:$0xf]
  %v165 = vld [vmem:[%s2 + $0x1c] sm:$0xf]
  %v166 = vld [vmem:[%s2 + $0x20] sm:$0xf]
  %v167 = vld [vmem:[%s2 + $0x24] sm:$0xf]
  %v168 = vld [vmem:[%s2 + $0x28] sm:$0xf]
  %v169 = vld [vmem:[%s2 + $0x2c] sm:$0xf]
  %v170 = vld [vmem:[%s2 + $0x30] sm:$0xf]
  %v171 = vld [vmem:[%s2 + $0x34] sm:$0xf]
  %v172 = vld [vmem:[%s2 + $0x38] sm:$0xf]
  %v173 = vld [vmem:[%s2 + $0x3c] sm:$0xf]
  %v174 = vlaneseq
  %v175 = vshrl.u32 %v174, 7
  %v176 = vsub.s32 3, %v175
  %v177 = vrot.slane %v24, %v176
  %v194 = vunpack.c.l.b16 %v158
  %v195 = vunpack.c.l.b16 %v159
  %v196 = vunpack.c.l.b16 %v160
  %v197 = vunpack.c.l.b16 %v161
  %v198 = vunpack.c.l.b16 %v162
  %v199 = vunpack.c.l.b16 %v163
  %v200 = vunpack.c.l.b16 %v164
  %v201 = vunpack.c.l.b16 %v165
  %v202 = vunpack.c.l.b16 %v166
  %v203 = vunpack.c.l.b16 %v167
  %v204 = vunpack.c.l.b16 %v168
  %v205 = vunpack.c.l.b16 %v169
  %v206 = vunpack.c.l.b16 %v170
  %v207 = vunpack.c.l.b16 %v171
  %v208 = vunpack.c.l.b16 %v172
  %v209 = vunpack.c.l.b16 %v173
  %v210 = vpack.c.b16 %v195, %v194
  %v211 = vpack.c.b16 %v197, %v196
  %v212 = vpack.c.b16 %v199, %v198
  %v213 = vpack.c.b16 %v201, %v200
  %v214 = vpack.c.b16 %v203, %v202
  %v215 = vpack.c.b16 %v205, %v204
  %v216 = vpack.c.b16 %v207, %v206
  %v217 = vpack.c.b16 %v209, %v208
  %226 = vmatprep.subr.bf16.mxu0 0
  %227 = vmatpush1.bf16.msra.mxu0 %v210
  %228 = vmatprep.subr.bf16.mxu0 0
  %229 = vmatpush1.bf16.msra.mxu0 %v211
  %230 = vmatprep.subr.bf16.mxu0 0
  %231 = vmatpush1.bf16.msra.mxu0 %v212
  %232 = vmatprep.subr.bf16.mxu0 0
  %233 = vmatpush1.bf16.msra.mxu0 %v213
  %234 = vmatprep.subr.bf16.mxu0 0
  %235 = vmatpush1.bf16.msra.mxu0 %v214
  %236 = vmatprep.subr.bf16.mxu0 0
  %237 = vmatpush1.bf16.msra.mxu0 %v215
  %238 = vmatprep.subr.bf16.mxu0 0
  %239 = vmatpush1.bf16.msra.mxu0 %v216
  %240 = vmatprep.subr.bf16.mxu0 0
  %241 = vmatpush1.bf16.msra.mxu0 %v217
  %242 = vmatprep.subr.bf16.mxu0 0
  %243 = vmatpush1.bf16.msra.mxu0 0
  %244 = vmatprep.subr.bf16.mxu0 0
  %245 = vmatpush1.bf16.msra.mxu0 0
  %246 = vmatprep.subr.bf16.mxu0 0
  %247 = vmatpush1.bf16.msra.mxu0 0
  %248 = vmatprep.subr.bf16.mxu0 0
  %249 = vmatpush1.bf16.msra.mxu0 0
  %250 = vmatprep.subr.bf16.mxu0 0
  %251 = vmatpush1.bf16.msra.mxu0 0
  %252 = vmatprep.subr.bf16.mxu0 0
  %253 = vmatpush1.bf16.msra.mxu0 0
  %254 = vmatprep.subr.bf16.mxu0 0
  %255 = vmatpush1.bf16.msra.mxu0 0
  %256 = vmatprep.subr.bf16.mxu0 0
  %257 = vmatpush1.bf16.msra.mxu0 0
  %258 = vmatprep.mubr.bf16.mxu0 0
  %259 = vmatmul.mubr.bf16.gmra.mrb[0].mxu0 %v157
  %v260 = vpop.f32.mrb[0].mxu0
  %v261 = vadd.f32 %v177, %v260
  %v262 = vpop.f32.mrb[0].mxu0
  %v263 = vpop.f32.mrb[0].mxu0
  %v264 = vadd.f32 %v177, %v263
  %v265 = vpop.f32.mrb[0].mxu0
  %266 = vdwg.mxu0
  %v267 = vmul.f32 %v261, 0.01
  %v268 = vmul.f32 %v264, 0.01
  %v269 = vmax.f32 %v261, %v267
  %v270 = vmax.f32 %v264, %v268
  %v271 = vpack.c.bf16 %v270, %v269
  %v272 = vld [vmem:[%s3] sm:$0xf]
  %v273 = vld [vmem:[%s3 + $0x4] sm:$0xf]
  %v274 = vld [vmem:[%s3 + $0x8] sm:$0xf]
  %v275 = vld [vmem:[%s3 + $0xc] sm:$0xf]
  %v276 = vld [vmem:[%s3 + $0x10] sm:$0xf]
  %v277 = vld [vmem:[%s3 + $0x14] sm:$0xf]
  %v278 = vld [vmem:[%s3 + $0x18] sm:$0xf]
  %v279 = vld [vmem:[%s3 + $0x1c] sm:$0xf]
  %v280 = vlaneseq
  %v281 = vshrl.u32 %v280, 7
  %v282 = vsub.s32 4, %v281
  %v283 = vrot.slane %v24, %v282
  %v292 = vunpack.c.l.b16 %v272
  %v293 = vunpack.c.l.b16 %v273
  %v294 = vunpack.c.l.b16 %v274
  %v295 = vunpack.c.l.b16 %v275
  %v296 = vunpack.c.l.b16 %v276
  %v297 = vunpack.c.l.b16 %v277
  %v298 = vunpack.c.l.b16 %v278
  %v299 = vunpack.c.l.b16 %v279
  %v300 = vpack.c.b16 %v293, %v292
  %v301 = vpack.c.b16 %v295, %v294
  %v302 = vpack.c.b16 %v297, %v296
  %v303 = vpack.c.b16 %v299, %v298
  %vm308 = vcmask 523264
  %v310 = vsel %vm308, %v271, 0
  %312 = vmatprep.subr.bf16.mxu0 0
  %313 = vmatpush1.bf16.msra.mxu0 %v300
  %314 = vmatprep.subr.bf16.mxu0 0
  %315 = vmatpush1.bf16.msra.mxu0 %v301
  %316 = vmatprep.subr.bf16.mxu0 0
  %317 = vmatpush1.bf16.msra.mxu0 %v302
  %318 = vmatprep.subr.bf16.mxu0 0
  %319 = vmatpush1.bf16.msra.mxu0 %v303
  %320 = vmatprep.subr.bf16.mxu0 0
  %321 = vmatpush1.bf16.msra.mxu0 0
  %322 = vmatprep.subr.bf16.mxu0 0
  %323 = vmatpush1.bf16.msra.mxu0 0
  %324 = vmatprep.subr.bf16.mxu0 0
  %325 = vmatpush1.bf16.msra.mxu0 0
  %326 = vmatprep.subr.bf16.mxu0 0
  %327 = vmatpush1.bf16.msra.mxu0 0
  %328 = vmatprep.subr.bf16.mxu0 0
  %329 = vmatpush1.bf16.msra.mxu0 0
  %330 = vmatprep.subr.bf16.mxu0 0
  %331 = vmatpush1.bf16.msra.mxu0 0
  %332 = vmatprep.subr.bf16.mxu0 0
  %333 = vmatpush1.bf16.msra.mxu0 0
  %334 = vmatprep.subr.bf16.mxu0 0
  %335 = vmatpush1.bf16.msra.mxu0 0
  %336 = vmatprep.subr.bf16.mxu0 0
  %337 = vmatpush1.bf16.msra.mxu0 0
  %338 = vmatprep.subr.bf16.mxu0 0
  %339 = vmatpush1.bf16.msra.mxu0 0
  %340 = vmatprep.subr.bf16.mxu0 0
  %341 = vmatpush1.bf16.msra.mxu0 0
  %342 = vmatprep.subr.bf16.mxu0 0
  %343 = vmatpush1.bf16.msra.mxu0 0
  %344 = vmatprep.mubr.bf16.mxu0 0
  %345 = vmatmul.mubr.bf16.gmra.mrb[0].mxu0 %v310
  %v346 = vpop.f32.mrb[0].mxu0
  %v347 = vadd.f32 %v283, %v346
  %v348 = vpop.f32.mrb[0].mxu0
  %v349 = vpop.f32.mrb[0].mxu0
  %v350 = vadd.f32 %v283, %v349
  %v351 = vpop.f32.mrb[0].mxu0
  %352 = vdwg.mxu0
  %v353 = vmul.f32 %v347, 0.01
  %v354 = vmul.f32 %v350, 0.01
  %v355 = vmax.f32 %v347, %v353
  %v356 = vmax.f32 %v350, %v354
  %v357 = vadd.f32 %v355, %v106
  %v358 = vadd.f32 %v356, %v110
  %v359 = vpack.c.bf16 %v358, %v357
  %v360 = vld [vmem:[%s4] sm:$0xf]
  %v361 = vld [vmem:[%s4 + $0x4] sm:$0xf]
  %v362 = vld [vmem:[%s4 + $0x8] sm:$0xf]
  %v363 = vld [vmem:[%s4 + $0xc] sm:$0xf]
  %v364 = vlaneseq
  %v365 = vshrl.u32 %v364, 7
  %v366 = vsub.s32 5, %v365
  %v367 = vrot.slane %v24, %v366
  %v372 = vunpack.c.l.b16 %v360
  %v373 = vunpack.c.l.b16 %v361
  %v374 = vunpack.c.l.b16 %v362
  %v375 = vunpack.c.l.b16 %v363
  %v376 = vpack.c.b16 %v373, %v372
  %v377 = vpack.c.b16 %v375, %v374
  %v381 = vsel %vm65, %v359, 0
  %383 = vmatprep.subr.bf16.mxu0 0
  %384 = vmatpush1.bf16.msra.mxu0 %v376
  %385 = vmatprep.subr.bf16.mxu0 0
  %386 = vmatpush1.bf16.msra.mxu0 %v377
  %387 = vmatprep.subr.bf16.mxu0 0
  %388 = vmatpush1.bf16.msra.mxu0 0
  %389 = vmatprep.subr.bf16.mxu0 0
  %390 = vmatpush1.bf16.msra.mxu0 0
  %391 = vmatprep.subr.bf16.mxu0 0
  %392 = vmatpush1.bf16.msra.mxu0 0
  %393 = vmatprep.subr.bf16.mxu0 0
  %394 = vmatpush1.bf16.msra.mxu0 0
  %395 = vmatprep.subr.bf16.mxu0 0
  %396 = vmatpush1.bf16.msra.mxu0 0
  %397 = vmatprep.subr.bf16.mxu0 0
  %398 = vmatpush1.bf16.msra.mxu0 0
  %399 = vmatprep.subr.bf16.mxu0 0
  %400 = vmatpush1.bf16.msra.mxu0 0
  %401 = vmatprep.subr.bf16.mxu0 0
  %402 = vmatpush1.bf16.msra.mxu0 0
  %403 = vmatprep.subr.bf16.mxu0 0
  %404 = vmatpush1.bf16.msra.mxu0 0
  %405 = vmatprep.subr.bf16.mxu0 0
  %406 = vmatpush1.bf16.msra.mxu0 0
  %407 = vmatprep.subr.bf16.mxu0 0
  %408 = vmatpush1.bf16.msra.mxu0 0
  %409 = vmatprep.subr.bf16.mxu0 0
  %410 = vmatpush1.bf16.msra.mxu0 0
  %411 = vmatprep.subr.bf16.mxu0 0
  %412 = vmatpush1.bf16.msra.mxu0 0
  %413 = vmatprep.subr.bf16.mxu0 0
  %414 = vmatpush1.bf16.msra.mxu0 0
  %415 = vmatprep.mubr.bf16.mxu0 0
  %416 = vmatmul.mubr.bf16.gmra.mrb[0].mxu0 %v381
  %v417 = vpop.f32.mrb[0].mxu0
  %v418 = vadd.f32 %v367, %v417
  %v419 = vpop.f32.mrb[0].mxu0
  %v420 = vpop.f32.mrb[0].mxu0
  %v421 = vadd.f32 %v367, %v420
  %v422 = vpop.f32.mrb[0].mxu0
  %423 = vdwg.mxu0
  %v424 = vmul.f32 %v418, 0.01
  %v425 = vmul.f32 %v421, 0.01
  %v426 = vmax.f32 %v418, %v424
  %v427 = vmax.f32 %v421, %v425
  %429 = vset.pattern.permute.xlu0 0
  %430 = vperm.xlu0 %429, %v24
  %v431 = vpop.permute.xlu0 %430
  %v432 = vrot.slane %v24, 6
  %v433 = vrot.slane %v431, 7
  %vm435 = vcmask 130048
  %v436 = vsel %vm435, %v432, 0
  %v439 = vsel %vm435, %v426, 0
  %v442 = vsel %vm435, %v427, 0
  %444 = vmatprep.subr.mxu0 0.0
  %445 = vmatpush1.xpose.msra.mxu0 %v439
  %446 = vmatprep.subr.mxu0 0.0
  %447 = vmatpush1.xpose.msra.mxu0 %v442
  %448 = vmatprep.subr.mxu0 0.0
  %449 = vmatpush1.xpose.msra.mxu0 0.0
  %450 = vmatprep.subr.mxu0 0.0
  %451 = vmatpush1.xpose.msra.mxu0 0.0
  %452 = vmatprep.subr.mxu0 0.0
  %453 = vmatpush1.xpose.msra.mxu0 0.0
  %454 = vmatprep.subr.mxu0 0.0
  %455 = vmatpush1.xpose.msra.mxu0 0.0
  %456 = vmatprep.subr.mxu0 0.0
  %457 = vmatpush1.xpose.msra.mxu0 0.0
  %458 = vmatprep.subr.mxu0 0.0
  %459 = vmatpush1.xpose.msra.mxu0 0.0
  %460 = vmatprep.subr.mxu0 0.0
  %461 = vmatpush1.xpose.msra.mxu0 0.0
  %462 = vmatprep.subr.mxu0 0.0
  %463 = vmatpush1.xpose.msra.mxu0 0.0
  %464 = vmatprep.subr.mxu0 0.0
  %465 = vmatpush1.xpose.msra.mxu0 0.0
  %466 = vmatprep.subr.mxu0 0.0
  %467 = vmatpush1.xpose.msra.mxu0 0.0
  %468 = vmatprep.subr.mxu0 0.0
  %469 = vmatpush1.xpose.msra.mxu0 0.0
  %470 = vmatprep.subr.mxu0 0.0
  %471 = vmatpush1.xpose.msra.mxu0 0.0
  %472 = vmatprep.subr.mxu0 0.0
  %473 = vmatpush1.xpose.msra.mxu0 0.0
  %474 = vmatprep.subr.mxu0 0.0
  %475 = vmatpush1.xpose.msra.mxu0 0.0
  %476 = vmatprep.subr.mxu0 0.0
  %477 = vmatpush1.xpose.msra.mxu0 0.0
  %478 = vmatprep.subr.mxu0 0.0
  %479 = vmatpush1.xpose.msra.mxu0 0.0
  %480 = vmatprep.subr.mxu0 0.0
  %481 = vmatpush1.xpose.msra.mxu0 0.0
  %482 = vmatprep.subr.mxu0 0.0
  %483 = vmatpush1.xpose.msra.mxu0 0.0
  %484 = vmatprep.subr.mxu0 0.0
  %485 = vmatpush1.xpose.msra.mxu0 0.0
  %486 = vmatprep.subr.mxu0 0.0
  %487 = vmatpush1.xpose.msra.mxu0 0.0
  %488 = vmatprep.subr.mxu0 0.0
  %489 = vmatpush1.xpose.msra.mxu0 0.0
  %490 = vmatprep.subr.mxu0 0.0
  %491 = vmatpush1.xpose.msra.mxu0 0.0
  %492 = vmatprep.subr.mxu0 0.0
  %493 = vmatpush1.xpose.msra.mxu0 0.0
  %494 = vmatprep.subr.mxu0 0.0
  %495 = vmatpush1.xpose.msra.mxu0 0.0
  %496 = vmatprep.subr.mxu0 0.0
  %497 = vmatpush1.xpose.msra.mxu0 0.0
  %498 = vmatprep.subr.mxu0 0.0
  %499 = vmatpush1.xpose.msra.mxu0 0.0
  %500 = vmatprep.subr.mxu0 0.0
  %501 = vmatpush1.xpose.msra.mxu0 0.0
  %502 = vmatprep.subr.mxu0 0.0
  %503 = vmatpush1.xpose.msra.mxu0 0.0
  %504 = vmatprep.subr.mxu0 0.0
  %505 = vmatpush1.xpose.msra.mxu0 0.0
  %506 = vmatprep.subr.mxu0 0.0
  %507 = vmatpush1.xpose.msra.mxu0 0.0
  %508 = vmatprep.mubr.f32.mxu0 0.0
  %509 = vmatmul.mubr.f32.gmra.mrb[0].mxu0 %v436
  %v510 = vpop.f32.mrb[0].mxu0
  %v511 = vadd.f32 %v433, %v510
  %v512 = vpop.f32.mrb[0].mxu0
  %513 = vdwg.mxu0
  %v514 = vxor.u32 %v511, 2147483648
  %v515 = vmul.f32 %v514, 1.442695
  %v516 = vpow.pop %v515
  %v517 = vadd.f32 %v516, 1.0
  %v518 = vrcp.pop %v517
  %v519 = vmul.f32 1.0, %v518
  %vm520 = vcmask 122880
  %521 = vst.msk [vmem:[%s6] sm:$0x1] %vm520, %v519
  // Predicated region
  $region26: #{ddos_forward.1} parent=0 // pred_check
    _
  $region27: #{ddos_forward.1} parent=0 // pred_check_branch
    %523 = sbr.rel (0) target = $region29
  $region28: #{ddos_forward.1} parent=0 // pred_region
    _
  $region29: #{ddos_forward.1} parent=0 // pred_fallthru
    _
  // Predicated region
  $region30: #{ddos_forward.1} parent=0 // pred_check
    _
  $region31: #{ddos_forward.1} parent=0 // pred_check_branch
    %525 = sbr.rel (0) target = $region33
  $region32: #{ddos_forward.1} parent=0 // pred_region
    _
  $region33: #{ddos_forward.1} parent=0 // pred_fallthru
    _

</llo_original>
